<compile_context>
chip_gen: v6e
topology: v6e:2x2x1
jax: 0.10.0
libtpu: 0.0.40
codegen_flags: <defaults>
</compile_context>

<pallas_src>
import functools

import jax
import jax.numpy as jnp
from jax.experimental import pallas as pl
from jax.experimental.pallas import tpu as pltpu

LANE = 128


def block_kernel(x_ref, w_ref, b_ref, gred_ref, gbc_ref, g_ref, bt_ref,
                 o_ref, stack_ref, *, l_valid, c_pad, b_blk, mm_dtype):
    # x_ref    : (Bb, C_pad, Lp)   activations (input dtype; bf16 stays bf16)
    # w_ref    : (C_out, 3*C_pad)  weight-standardized taps, fused K, mm_dtype
    # b_ref    : (C_out, 1)        conv bias (f32)
    # gred_ref : (groups, C_out)   group reduce matrix, carries 1/(cpg*L)
    # gbc_ref  : (C_out, groups)   group broadcast (indicator) matrix
    # g_ref    : (Bb, C_out, 1)    gamma  (optional scale/shift already folded)
    # bt_ref   : (Bb, C_out, 1)    beta
    # o_ref    : (Bb, C_out, Lp)
    # stack_ref: (3*C_pad, Lp)     VMEM scratch for the tap stack (mm_dtype)
    l_pad = x_ref.shape[-1]

    # Small, grid-invariant operands: load once, reuse for the whole batch block.
    w = w_ref[...]
    bias = b_ref[...].astype(jnp.float32)
    gred = gred_ref[...]
    gbc = gbc_ref[...]

    # Boundary masks, hoisted out of the unrolled batch loop (JAX does not CSE
    # broadcast_in_dim).  They realize the conv zero-padding AND kill the roll
    # wrap-around, so every padded lane of y is exactly zero and the GroupNorm
    # stats need no separate masking pass over (C_out, Lp).
    col = jax.lax.broadcasted_iota(jnp.int32, (c_pad, l_pad), 1)
    prev_keep = jnp.logical_not((col == 0) | (col == l_valid))
    next_keep = jnp.logical_not((col == l_valid - 1) | (col == l_pad - 1))
    lf = float(l_valid)

    for bb in range(b_blk):                       # static unroll over the batch block
        x = x_ref[bb]
        if x.dtype != mm_dtype:
            x = x.astype(mm_dtype)

        # --- conv1d (k=3, stride=1, pad=1) as ONE fused-K MXU matmul ---------
        # Tap stack written at 8/16-sublane-aligned offsets into VMEM scratch.
        x_prev = pltpu.roll(x, shift=1, axis=1)            # x[:, l-1]
        x_next = pltpu.roll(x, shift=l_pad - 1, axis=1)    # x[:, l+1]
        stack_ref[0:c_pad, :] = jnp.where(prev_keep, x_prev, jnp.zeros_like(x_prev))
        stack_ref[c_pad:2 * c_pad, :] = x
        stack_ref[2 * c_pad:3 * c_pad, :] = jnp.where(next_keep, x_next,
                                                      jnp.zeros_like(x_next))

        y = jnp.dot(w, stack_ref[...], preferred_element_type=jnp.float32)  # (C_out, Lp) f32

        # --- GroupNorm of (y + bias): one sum / sum-of-squares pass ----------
        # Bias is folded into the (C_out, 1) stats and the affine, never into a
        # full-width pass.  Padded lanes of y are exactly zero (masks above).
        row_sum = jnp.sum(y, axis=1, keepdims=True)                 # (C_out, 1)
        row_sq = jnp.sum(y * y, axis=1, keepdims=True)              # (C_out, 1)
        s1 = row_sum + bias * lf                                     # sum(y+b)
        s2 = row_sq + 2.0 * bias * row_sum + bias * bias * lf        # sum((y+b)^2)
        stats = jnp.concatenate([s1, s2], axis=1)                    # (C_out, 2)
        grp = jnp.dot(gred, stats, preferred_element_type=jnp.float32)   # (groups, 2)
        per_ch = jnp.dot(gbc, grp, preferred_element_type=jnp.float32)   # (C_out, 2)
        mean = per_ch[:, 0:1]
        var = jnp.maximum(per_ch[:, 1:2] - mean * mean, 0.0)        # guard one-pass cancel
        inv_std = jax.lax.rsqrt(var + 1e-5)

        # --- affine (gamma/beta carry scale/shift and the conv bias) + SiLU ---
        gamma = g_ref[bb].astype(jnp.float32)                        # (C_out, 1)
        beta = bt_ref[bb].astype(jnp.float32)
        a = inv_std * gamma
        c = beta + (bias - mean) * a
        yn = y * a + c
        sig = pl.reciprocal(1.0 + jnp.exp(-yn), approx=False)        # exp/recip on EUP
        o_ref[bb] = (yn * sig).astype(o_ref.dtype)


def block_forward(x, weight, bias, gamma, beta, scale_shift=None, *, groups=8):
    """x: (B, C_in, L); weight: (C_out, C_in, 3); bias/gamma/beta: (C_out,)."""
    B, c_in, L = x.shape
    c_out, c_in_w, K = weight.shape
    if K != 3 or c_in_w != c_in:
        raise ValueError("expected a (C_out, C_in, 3) conv weight matching x")
    if c_out % groups != 0:
        raise ValueError(f"c_out={c_out} must be divisible by groups={groups}")
    cpg = c_out // groups

    # ---- matmul dtype & tile-aligned padding ---------------------------------
    mm_dtype = jnp.bfloat16 if x.dtype == jnp.bfloat16 else jnp.float32
    sub = 16 if mm_dtype == jnp.bfloat16 else 8           # sublane packing of mm_dtype
    c_pad = -(-c_in // sub) * sub
    l_pad = max(LANE, -(-L // LANE) * LANE)

    # ---- weight standardization, hoisted out of the per-batch grid -----------
    eps_ws = 1e-5 if x.dtype == jnp.float32 else 1e-3     # matches the PyTorch module
    wf = weight.astype(jnp.float32)
    w_mean = jnp.mean(wf, axis=(1, 2), keepdims=True)
    w_var = jnp.mean((wf - w_mean) ** 2, axis=(1, 2), keepdims=True)  # unbiased=False
    w_hat = (wf - w_mean) * jax.lax.rsqrt(w_var + eps_ws)
    # (C_out, C_in, 3) -> (C_out, 3, C_pad) -> (C_out, 3*C_pad): tap-major, channel-padded.
    w_fused = jnp.transpose(w_hat, (0, 2, 1))
    w_fused = jnp.pad(w_fused, ((0, 0), (0, 0), (0, c_pad - c_in)))
    w_fused = w_fused.reshape(c_out, 3 * c_pad).astype(mm_dtype)

    # ---- fold the optional scale/shift into gamma/beta (always (B, C_out, 1)) -
    g32 = gamma.astype(jnp.float32).reshape(c_out, 1)
    bt32 = beta.astype(jnp.float32).reshape(c_out, 1)
    if scale_shift is None:
        gamma_eff = jnp.broadcast_to(g32[None], (B, c_out, 1))
        beta_eff = jnp.broadcast_to(bt32[None], (B, c_out, 1))
    else:
        scale, shift = scale_shift
        scale = jnp.asarray(scale, jnp.float32)
        shift = jnp.asarray(shift, jnp.float32)
        if scale.ndim == 2:
            scale = scale[..., None]
        if shift.ndim == 2:
            shift = shift[..., None]
        scale = jnp.broadcast_to(scale, (B, c_out, 1))
        shift = jnp.broadcast_to(shift, (B, c_out, 1))
        gamma_eff = g32[None] * (scale + 1.0)
        beta_eff = bt32[None] * (scale + 1.0) + shift

    # ---- pad channels (sublane-aligned stack) and L (lane-dense stores) ------
    x_in = jnp.pad(x, ((0, 0), (0, c_pad - c_in), (0, l_pad - L)))

    b2 = bias.astype(jnp.float32).reshape(c_out, 1)
    gidx = jnp.arange(c_out) // cpg
    gar = jnp.arange(groups)
    gred = (gar[:, None] == gidx[None, :]).astype(jnp.float32) / float(cpg * L)
    gbc = (gidx[:, None] == gar[None, :]).astype(jnp.float32)

    # ---- generation-aware VMEM budget & batch blocking ------------------------
    isz_x = jnp.dtype(x.dtype).itemsize
    isz_mm = jnp.dtype(mm_dtype).itemsize
    try:
        vmem_cap = int(getattr(pltpu.get_tpu_info(), "vmem_capacity_bytes", 128 * 2 ** 20))
    except Exception:
        vmem_cap = 128 * 2 ** 20
    # ~48 MiB on v7x (64 MiB physical/TC), ~96 MiB on v5e/v6e (128 MiB physical).
    budget = int(min(0.75 * vmem_cap, 100 * 2 ** 20))

    def step_footprint(bb):
        blocks = 2 * bb * (c_pad + c_out) * l_pad * isz_x            # dbl-buffered x / out
        scratch = 3 * c_pad * l_pad * isz_mm                         # tap stack
        temps = (2 * c_pad * isz_mm + 3 * c_out * 4) * l_pad         # rolls + f32 y / yn
        small = 4 * (3 * c_pad * c_out + 2 * groups * c_out + (3 + 2 * bb) * c_out)
        return blocks + scratch + temps + small

    b_blk = 1
    for cand in range(min(B, 8), 0, -1):   # fatter grid steps amortize ~0.35us/step
        if B % cand == 0 and step_footprint(cand) <= budget:
            b_blk = cand
            break
    vmem_limit = int(min(budget, max(32 * 2 ** 20, int(1.25 * step_footprint(b_blk)))))

    kernel = functools.partial(block_kernel, l_valid=L, c_pad=c_pad,
                               b_blk=b_blk, mm_dtype=mm_dtype)
    out = pl.pallas_call(
        kernel,
        out_shape=jax.ShapeDtypeStruct((B, c_out, l_pad), x.dtype),
        grid=(B // b_blk,),
        in_specs=[
            pl.BlockSpec((b_blk, c_pad, l_pad), lambda i: (i, 0, 0)),   # x
            pl.BlockSpec((c_out, 3 * c_pad), lambda i: (0, 0)),         # fused w_hat
            pl.BlockSpec((c_out, 1), lambda i: (0, 0)),                 # conv bias
            pl.BlockSpec((groups, c_out), lambda i: (0, 0)),            # group reduce
            pl.BlockSpec((c_out, groups), lambda i: (0, 0)),            # group broadcast
            pl.BlockSpec((b_blk, c_out, 1), lambda i: (i, 0, 0)),       # gamma_eff
            pl.BlockSpec((b_blk, c_out, 1), lambda i: (i, 0, 0)),       # beta_eff
        ],
        out_specs=pl.BlockSpec((b_blk, c_out, l_pad), lambda i: (i, 0, 0)),
        scratch_shapes=[pltpu.VMEM((3 * c_pad, l_pad), mm_dtype)],
        compiler_params=pltpu.CompilerParams(
            dimension_semantics=("parallel",),
            vmem_limit_bytes=vmem_limit),
    )(x_in, w_fused, b2, gred, gbc, gamma_eff, beta_eff)
    return out if l_pad == L else out[:, :, :L]


def block_reference(x, weight, bias, gamma, beta, scale_shift=None, *, groups=8):
    """Pure-JAX (f32) reference mirroring the PyTorch module."""
    eps = 1e-5 if x.dtype == jnp.float32 else 1e-3
    xf = x.astype(jnp.float32)
    wf = weight.astype(jnp.float32)
    mean = wf.mean(axis=(1, 2), keepdims=True)
    var = ((wf - mean) ** 2).mean(axis=(1, 2), keepdims=True)
    w_hat = (wf - mean) / jnp.sqrt(var + eps)
    y = jax.lax.conv_general_dilated(
        xf, w_hat, window_strides=(1,), padding=[(1, 1)],
        dimension_numbers=("NCH", "OIH", "NCH"))
    y = y + bias.astype(jnp.float32)[None, :, None]
    B_, C, L_ = y.shape
    yg = y.reshape(B_, groups, -1)
    gm = yg.mean(axis=2, keepdims=True)
    gv = ((yg - gm) ** 2).mean(axis=2, keepdims=True)
    yn = ((yg - gm) / jnp.sqrt(gv + 1e-5)).reshape(B_, C, L_)
    yn = yn * gamma.astype(jnp.float32)[None, :, None] + beta.astype(jnp.float32)[None, :, None]
    if scale_shift is not None:
        s, t = scale_shift
        s = jnp.asarray(s, jnp.float32)
        t = jnp.asarray(t, jnp.float32)
        if s.ndim == 2:
            s = s[..., None]
        if t.ndim == 2:
            t = t[..., None]
        yn = yn * (s + 1.0) + t
    return yn * jax.nn.sigmoid(yn)


if __name__ == "__main__":
    # Shapes consistent with Block(dim=4, dim_out=8, groups=8) on 1-D data.
    B, dim, dim_out, L, groups = 2, 4, 8, 16, 8

    key = jax.random.PRNGKey(0)
    k_x, k_w, k_b, k_g, k_bt, k_s, k_t, k_x2 = jax.random.split(key, 8)
    x = jax.random.normal(k_x, (B, dim, L), jnp.float32)
    weight = jax.random.normal(k_w, (dim_out, dim, 3), jnp.float32) * 0.3
    bias = jax.random.normal(k_b, (dim_out,), jnp.float32) * 0.1
    gamma = 1.0 + 0.1 * jax.random.normal(k_g, (dim_out,), jnp.float32)
    beta = 0.1 * jax.random.normal(k_bt, (dim_out,), jnp.float32)
    scale = 0.2 * jax.random.normal(k_s, (B, dim_out, 1), jnp.float32)
    shift = 0.2 * jax.random.normal(k_t, (B, dim_out, 1), jnp.float32)

    # Case 1: scale_shift=None, L < 128 (lane padding + extended boundary masks).
    out1 = jax.block_until_ready(
        block_forward(x, weight, bias, gamma, beta, None, groups=groups))
    ref1 = block_reference(x, weight, bias, gamma, beta, None, groups=groups)
    assert out1.shape == (B, dim_out, L)
    assert jnp.allclose(out1, ref1, atol=2e-5, rtol=2e-5)

    # Case 2: with per-batch scale/shift folded into gamma/beta.
    out2 = jax.block_until_ready(
        block_forward(x, weight, bias, gamma, beta, (scale, shift), groups=groups))
    ref2 = block_reference(x, weight, bias, gamma, beta, (scale, shift), groups=groups)
    assert jnp.allclose(out2, ref2, atol=2e-5, rtol=2e-5)

    # Case 3: lane-aligned L (no padding; roll wrap-around handled by the masks).
    x3 = jax.random.normal(k_x2, (B, dim, 128), jnp.float32)
    out3 = jax.block_until_ready(
        block_forward(x3, weight, bias, gamma, beta, (scale, shift), groups=groups))
    ref3 = block_reference(x3, weight, bias, gamma, beta, (scale, shift), groups=groups)
    assert jnp.allclose(out3, ref3, atol=2e-5, rtol=2e-5)

    # Case 4: bf16 activations -> bf16 MXU path, f32 epilogue.
    xb = x.astype(jnp.bfloat16)
    out4 = jax.block_until_ready(
        block_forward(xb, weight, bias, gamma, beta, (scale, shift), groups=groups))
    ref4 = block_reference(xb, weight, bias, gamma, beta, (scale, shift), groups=groups)
    assert out4.dtype == jnp.bfloat16
    assert jnp.allclose(out4.astype(jnp.float32), ref4, atol=6e-2, rtol=6e-2)

    print("KERNEL_OK")
</pallas_src>

<mosaic_0001>
module attributes {stable_mosaic.version = 11 : i64} {
  func.func @block_kernel(%arg0: i32, %arg1: memref<2x8x128xf32, #tpu.memory_space<vmem>>, %arg2: memref<8x24xf32, #tpu.memory_space<vmem>>, %arg3: memref<8x1xf32, #tpu.memory_space<vmem>>, %arg4: memref<8x8xf32, #tpu.memory_space<vmem>>, %arg5: memref<8x8xf32, #tpu.memory_space<vmem>>, %arg6: memref<2x8x1xf32, #tpu.memory_space<vmem>>, %arg7: memref<2x8x1xf32, #tpu.memory_space<vmem>>, %arg8: memref<2x8x128xf32, #tpu.memory_space<vmem>>, %arg9: memref<24x128xf32, #tpu.memory_space<vmem>>) attributes {dimension_semantics = [#tpu.dimension_semantics<parallel>], iteration_bounds = array<i64: 1>, scalar_prefetch = 0 : i64, scratch_operands = 1 : i64, tpu.core_type = #tpu.core_type<tc>, window_params = [{transform_indices = @transform_0, window_bounds = array<i64: 2, 8, 128>}, {pipeline_mode = #tpu.pipeline_mode<synchronous>, transform_indices = @transform_1, window_bounds = array<i64: 8, 24>}, {pipeline_mode = #tpu.pipeline_mode<synchronous>, transform_indices = @transform_2, window_bounds = array<i64: 8, 1>}, {pipeline_mode = #tpu.pipeline_mode<synchronous>, transform_indices = @transform_3, window_bounds = array<i64: 8, 8>}, {pipeline_mode = #tpu.pipeline_mode<synchronous>, transform_indices = @transform_4, window_bounds = array<i64: 8, 8>}, {transform_indices = @transform_5, window_bounds = array<i64: 2, 8, 1>}, {transform_indices = @transform_6, window_bounds = array<i64: 2, 8, 1>}, {transform_indices = @transform_7, window_bounds = array<i64: 2, 8, 128>}]} {
    %c0 = arith.constant 0 : index
    %c0_0 = arith.constant 0 : index
    %0 = vector.load %arg2[%c0, %c0_0] : memref<8x24xf32, #tpu.memory_space<vmem>>, vector<8x24xf32>
    %c0_1 = arith.constant 0 : index
    %c0_2 = arith.constant 0 : index
    %1 = vector.load %arg3[%c0_1, %c0_2] : memref<8x1xf32, #tpu.memory_space<vmem>>, vector<8x1xf32>
    %c0_3 = arith.constant 0 : index
    %c0_4 = arith.constant 0 : index
    %2 = vector.load %arg4[%c0_3, %c0_4] : memref<8x8xf32, #tpu.memory_space<vmem>>, vector<8x8xf32>
    %c0_5 = arith.constant 0 : index
    %c0_6 = arith.constant 0 : index
    %3 = vector.load %arg5[%c0_5, %c0_6] : memref<8x8xf32, #tpu.memory_space<vmem>>, vector<8x8xf32>
    %4 = tpu.iota {dimensions = array<i32: 1>} : vector<8x128xi32>
    %c0_i32 = arith.constant 0 : i32
    %5 = vector.broadcast %c0_i32 : i32 to vector<8x128xi32>
    %6 = arith.cmpi eq, %4, %5 : vector<8x128xi32>
    %c16_i32 = arith.constant 16 : i32
    %7 = vector.broadcast %c16_i32 : i32 to vector<8x128xi32>
    %8 = arith.cmpi eq, %4, %7 : vector<8x128xi32>
    %9 = arith.ori %6, %8 : vector<8x128xi1>
    %cst = arith.constant dense<true> : vector<8x128xi1>
    %10 = arith.xori %9, %cst : vector<8x128xi1>
    %c15_i32 = arith.constant 15 : i32
    %11 = vector.broadcast %c15_i32 : i32 to vector<8x128xi32>
    %12 = arith.cmpi eq, %4, %11 : vector<8x128xi32>
    %c127_i32 = arith.constant 127 : i32
    %13 = vector.broadcast %c127_i32 : i32 to vector<8x128xi32>
    %14 = arith.cmpi eq, %4, %13 : vector<8x128xi32>
    %15 = arith.ori %12, %14 : vector<8x128xi1>
    %cst_7 = arith.constant dense<true> : vector<8x128xi1>
    %16 = arith.xori %15, %cst_7 : vector<8x128xi1>
    %c0_8 = arith.constant 0 : index
    %c0_9 = arith.constant 0 : index
    %c0_10 = arith.constant 0 : index
    %17 = vector.load %arg1[%c0_8, %c0_9, %c0_10] : memref<2x8x128xf32, #tpu.memory_space<vmem>>, vector<1x8x128xf32>
    %18 = vector.shape_cast %17 : vector<1x8x128xf32> to vector<8x128xf32>
    %c1_i32 = arith.constant 1 : i32
    %19 = tpu.dynamic_rotate %18 by %c1_i32 dim 1 : vector<8x128xf32>, i32 -> vector<8x128xf32>
    %c127_i32_11 = arith.constant 127 : i32
    %20 = tpu.dynamic_rotate %18 by %c127_i32_11 dim 1 : vector<8x128xf32>, i32 -> vector<8x128xf32>
    %cst_12 = arith.constant 0.000000e+00 : f32
    %21 = vector.broadcast %cst_12 : f32 to vector<8x128xf32>
    %22 = arith.select %10, %19, %21 : vector<8x128xi1>, vector<8x128xf32>
    %c0_13 = arith.constant 0 : index
    %c0_14 = arith.constant 0 : index
    %23 = vector.load %arg9[%c0_13, %c0_14] : memref<24x128xf32, #tpu.memory_space<vmem>>, vector<8x128xf32>
    tpu.vector_store %arg9[%c0_13, %c0_14], %22 {strides = array<i32>} : memref<24x128xf32, #tpu.memory_space<vmem>>, vector<8x128xf32>,
    %c8 = arith.constant 8 : index
    %c0_15 = arith.constant 0 : index
    %24 = vector.load %arg9[%c8, %c0_15] : memref<24x128xf32, #tpu.memory_space<vmem>>, vector<8x128xf32>
    tpu.vector_store %arg9[%c8, %c0_15], %18 {strides = array<i32>} : memref<24x128xf32, #tpu.memory_space<vmem>>, vector<8x128xf32>,
    %cst_16 = arith.constant 0.000000e+00 : f32
    %25 = vector.broadcast %cst_16 : f32 to vector<8x128xf32>
    %26 = arith.select %16, %20, %25 : vector<8x128xi1>, vector<8x128xf32>
    %c16 = arith.constant 16 : index
    %c0_17 = arith.constant 0 : index
    %27 = vector.load %arg9[%c16, %c0_17] : memref<24x128xf32, #tpu.memory_space<vmem>>, vector<8x128xf32>
    tpu.vector_store %arg9[%c16, %c0_17], %26 {strides = array<i32>} : memref<24x128xf32, #tpu.memory_space<vmem>>, vector<8x128xf32>,
    %c0_18 = arith.constant 0 : index
    %c0_19 = arith.constant 0 : index
    %28 = vector.load %arg9[%c0_18, %c0_19] : memref<24x128xf32, #tpu.memory_space<vmem>>, vector<24x128xf32>
    %cst_20 = arith.constant dense<0.000000e+00> : vector<8x128xf32>
    %29 = tpu.matmul %0, %28, %cst_20 {dimension_numbers = #tpu.dot_dimension_numbers<[1], [0], [0], [1], [0, 0, 1, 1], [], []>} : vector<8x24xf32>, vector<24x128xf32>, vector<8x128xf32> -> vector<8x128xf32>
    %cst_21 = arith.constant dense<0.000000e+00> : vector<8xf32>
    %30 = vector.multi_reduction <add>, %29, %cst_21 [1] : vector<8x128xf32> to vector<8xf32>
    %31 = vector.shape_cast %30 : vector<8xf32> to vector<8x1xf32>
    %32 = arith.mulf %29, %29 : vector<8x128xf32>
    %cst_22 = arith.constant dense<0.000000e+00> : vector<8xf32>
    %33 = vector.multi_reduction <add>, %32, %cst_22 [1] : vector<8x128xf32> to vector<8xf32>
    %34 = vector.shape_cast %33 : vector<8xf32> to vector<8x1xf32>
    %cst_23 = arith.constant 1.600000e+01 : f32
    %35 = vector.broadcast %cst_23 : f32 to vector<8x1xf32>
    %36 = arith.mulf %1, %35 : vector<8x1xf32>
    %37 = arith.addf %31, %36 : vector<8x1xf32>
    %cst_24 = arith.constant 2.000000e+00 : f32
    %38 = vector.broadcast %cst_24 : f32 to vector<8x1xf32>
    %39 = arith.mulf %38, %1 : vector<8x1xf32>
    %40 = arith.mulf %39, %31 : vector<8x1xf32>
    %41 = arith.addf %34, %40 : vector<8x1xf32>
    %42 = arith.mulf %1, %1 : vector<8x1xf32>
    %cst_25 = arith.constant 1.600000e+01 : f32
    %43 = vector.broadcast %cst_25 : f32 to vector<8x1xf32>
    %44 = arith.mulf %42, %43 : vector<8x1xf32>
    %45 = arith.addf %41, %44 : vector<8x1xf32>
    %46 = tpu.concatenate %37, %45 in 1 : vector<8x1xf32>, vector<8x1xf32> -> vector<8x2xf32>
    %cst_26 = arith.constant dense<0.000000e+00> : vector<8x2xf32>
    %47 = tpu.matmul %2, %46, %cst_26 {dimension_numbers = #tpu.dot_dimension_numbers<[1], [0], [0], [1], [0, 0, 1, 1], [], []>} : vector<8x8xf32>, vector<8x2xf32>, vector<8x2xf32> -> vector<8x2xf32>
    %cst_27 = arith.constant dense<0.000000e+00> : vector<8x2xf32>
    %48 = tpu.matmul %3, %47, %cst_27 {dimension_numbers = #tpu.dot_dimension_numbers<[1], [0], [0], [1], [0, 0, 1, 1], [], []>} : vector<8x8xf32>, vector<8x2xf32>, vector<8x2xf32> -> vector<8x2xf32>
    %49 = vector.extract_strided_slice %48 {offsets = [0, 0], sizes = [8, 1], strides = [1, 1]} : vector<8x2xf32> to vector<8x1xf32>
    %50 = vector.extract_strided_slice %48 {offsets = [0, 1], sizes = [8, 1], strides = [1, 1]} : vector<8x2xf32> to vector<8x1xf32>
    %51 = arith.mulf %49, %49 : vector<8x1xf32>
    %52 = arith.subf %50, %51 : vector<8x1xf32>
    %cst_28 = arith.constant 0.000000e+00 : f32
    %53 = vector.broadcast %cst_28 : f32 to vector<8x1xf32>
    %54 = arith.maximumf %52, %53 : vector<8x1xf32>
    %cst_29 = arith.constant 9.99999974E-6 : f32
    %55 = vector.broadcast %cst_29 : f32 to vector<8x1xf32>
    %56 = arith.addf %54, %55 : vector<8x1xf32>
    %57 = math.rsqrt %56 : vector<8x1xf32>
    %c0_30 = arith.constant 0 : index
    %c0_31 = arith.constant 0 : index
    %c0_32 = arith.constant 0 : index
    %58 = vector.load %arg6[%c0_30, %c0_31, %c0_32] : memref<2x8x1xf32, #tpu.memory_space<vmem>>, vector<1x8x1xf32>
    %59 = vector.shape_cast %58 : vector<1x8x1xf32> to vector<8x1xf32>
    %c0_33 = arith.constant 0 : index
    %c0_34 = arith.constant 0 : index
    %c0_35 = arith.constant 0 : index
    %60 = vector.load %arg7[%c0_33, %c0_34, %c0_35] : memref<2x8x1xf32, #tpu.memory_space<vmem>>, vector<1x8x1xf32>
    %61 = vector.shape_cast %60 : vector<1x8x1xf32> to vector<8x1xf32>
    %62 = arith.mulf %57, %59 : vector<8x1xf32>
    %63 = arith.subf %1, %49 : vector<8x1xf32>
    %64 = arith.mulf %63, %62 : vector<8x1xf32>
    %65 = arith.addf %61, %64 : vector<8x1xf32>
    %66 = vector.broadcast %62 : vector<8x1xf32> to vector<8x128xf32>
    %67 = arith.mulf %29, %66 : vector<8x128xf32>
    %68 = vector.broadcast %65 : vector<8x1xf32> to vector<8x128xf32>
    %69 = arith.addf %67, %68 : vector<8x128xf32>
    %cst_36 = arith.constant 0.000000e+00 : f32
    %70 = vector.broadcast %cst_36 : f32 to vector<8x128xf32>
    %71 = arith.subf %70, %69 : vector<8x128xf32>
    %72 = math.exp %71 : vector<8x128xf32>
    %cst_37 = arith.constant 1.000000e+00 : f32
    %73 = vector.broadcast %cst_37 : f32 to vector<8x128xf32>
    %74 = arith.addf %73, %72 : vector<8x128xf32>
    %75 = tpu.reciprocal %74 : vector<8x128xf32> -> vector<8x128xf32>
    %76 = arith.mulf %69, %75 : vector<8x128xf32>
    %c0_38 = arith.constant 0 : index
    %c0_39 = arith.constant 0 : index
    %c0_40 = arith.constant 0 : index
    %77 = vector.load %arg8[%c0_38, %c0_39, %c0_40] : memref<2x8x128xf32, #tpu.memory_space<vmem>>, vector<1x8x128xf32>
    %78 = vector.shape_cast %77 : vector<1x8x128xf32> to vector<8x128xf32>
    %79 = vector.shape_cast %76 : vector<8x128xf32> to vector<1x8x128xf32>
    tpu.vector_store %arg8[%c0_38, %c0_39, %c0_40], %79 {strides = array<i32>} : memref<2x8x128xf32, #tpu.memory_space<vmem>>, vector<1x8x128xf32>,
    %c1 = arith.constant 1 : index
    %c0_41 = arith.constant 0 : index
    %c0_42 = arith.constant 0 : index
    %80 = vector.load %arg1[%c1, %c0_41, %c0_42] : memref<2x8x128xf32, #tpu.memory_space<vmem>>, vector<1x8x128xf32>
    %81 = vector.shape_cast %80 : vector<1x8x128xf32> to vector<8x128xf32>
    %c1_i32_43 = arith.constant 1 : i32
    %82 = tpu.dynamic_rotate %81 by %c1_i32_43 dim 1 : vector<8x128xf32>, i32 -> vector<8x128xf32>
    %c127_i32_44 = arith.constant 127 : i32
    %83 = tpu.dynamic_rotate %81 by %c127_i32_44 dim 1 : vector<8x128xf32>, i32 -> vector<8x128xf32>
    %cst_45 = arith.constant 0.000000e+00 : f32
    %84 = vector.broadcast %cst_45 : f32 to vector<8x128xf32>
    %85 = arith.select %10, %82, %84 : vector<8x128xi1>, vector<8x128xf32>
    %c0_46 = arith.constant 0 : index
    %c0_47 = arith.constant 0 : index
    %86 = vector.load %arg9[%c0_46, %c0_47] : memref<24x128xf32, #tpu.memory_space<vmem>>, vector<8x128xf32>
    tpu.vector_store %arg9[%c0_46, %c0_47], %85 {strides = array<i32>} : memref<24x128xf32, #tpu.memory_space<vmem>>, vector<8x128xf32>,
    %c8_48 = arith.constant 8 : index
    %c0_49 = arith.constant 0 : index
    %87 = vector.load %arg9[%c8_48, %c0_49] : memref<24x128xf32, #tpu.memory_space<vmem>>, vector<8x128xf32>
    tpu.vector_store %arg9[%c8_48, %c0_49], %81 {strides = array<i32>} : memref<24x128xf32, #tpu.memory_space<vmem>>, vector<8x128xf32>,
    %cst_50 = arith.constant 0.000000e+00 : f32
    %88 = vector.broadcast %cst_50 : f32 to vector<8x128xf32>
    %89 = arith.select %16, %83, %88 : vector<8x128xi1>, vector<8x128xf32>
    %c16_51 = arith.constant 16 : index
    %c0_52 = arith.constant 0 : index
    %90 = vector.load %arg9[%c16_51, %c0_52] : memref<24x128xf32, #tpu.memory_space<vmem>>, vector<8x128xf32>
    tpu.vector_store %arg9[%c16_51, %c0_52], %89 {strides = array<i32>} : memref<24x128xf32, #tpu.memory_space<vmem>>, vector<8x128xf32>,
    %c0_53 = arith.constant 0 : index
    %c0_54 = arith.constant 0 : index
    %91 = vector.load %arg9[%c0_53, %c0_54] : memref<24x128xf32, #tpu.memory_space<vmem>>, vector<24x128xf32>
    %cst_55 = arith.constant dense<0.000000e+00> : vector<8x128xf32>
    %92 = tpu.matmul %0, %91, %cst_55 {dimension_numbers = #tpu.dot_dimension_numbers<[1], [0], [0], [1], [0, 0, 1, 1], [], []>} : vector<8x24xf32>, vector<24x128xf32>, vector<8x128xf32> -> vector<8x128xf32>
    %cst_56 = arith.constant dense<0.000000e+00> : vector<8xf32>
    %93 = vector.multi_reduction <add>, %92, %cst_56 [1] : vector<8x128xf32> to vector<8xf32>
    %94 = vector.shape_cast %93 : vector<8xf32> to vector<8x1xf32>
    %95 = arith.mulf %92, %92 : vector<8x128xf32>
    %cst_57 = arith.constant dense<0.000000e+00> : vector<8xf32>
    %96 = vector.multi_reduction <add>, %95, %cst_57 [1] : vector<8x128xf32> to vector<8xf32>
    %97 = vector.shape_cast %96 : vector<8xf32> to vector<8x1xf32>
    %cst_58 = arith.constant 1.600000e+01 : f32
    %98 = vector.broadcast %cst_58 : f32 to vector<8x1xf32>
    %99 = arith.mulf %1, %98 : vector<8x1xf32>
    %100 = arith.addf %94, %99 : vector<8x1xf32>
    %cst_59 = arith.constant 2.000000e+00 : f32
    %101 = vector.broadcast %cst_59 : f32 to vector<8x1xf32>
    %102 = arith.mulf %101, %1 : vector<8x1xf32>
    %103 = arith.mulf %102, %94 : vector<8x1xf32>
    %104 = arith.addf %97, %103 : vector<8x1xf32>
    %105 = arith.mulf %1, %1 : vector<8x1xf32>
    %cst_60 = arith.constant 1.600000e+01 : f32
    %106 = vector.broadcast %cst_60 : f32 to vector<8x1xf32>
    %107 = arith.mulf %105, %106 : vector<8x1xf32>
    %108 = arith.addf %104, %107 : vector<8x1xf32>
    %109 = tpu.concatenate %100, %108 in 1 : vector<8x1xf32>, vector<8x1xf32> -> vector<8x2xf32>
    %cst_61 = arith.constant dense<0.000000e+00> : vector<8x2xf32>
    %110 = tpu.matmul %2, %109, %cst_61 {dimension_numbers = #tpu.dot_dimension_numbers<[1], [0], [0], [1], [0, 0, 1, 1], [], []>} : vector<8x8xf32>, vector<8x2xf32>, vector<8x2xf32> -> vector<8x2xf32>
    %cst_62 = arith.constant dense<0.000000e+00> : vector<8x2xf32>
    %111 = tpu.matmul %3, %110, %cst_62 {dimension_numbers = #tpu.dot_dimension_numbers<[1], [0], [0], [1], [0, 0, 1, 1], [], []>} : vector<8x8xf32>, vector<8x2xf32>, vector<8x2xf32> -> vector<8x2xf32>
    %112 = vector.extract_strided_slice %111 {offsets = [0, 0], sizes = [8, 1], strides = [1, 1]} : vector<8x2xf32> to vector<8x1xf32>
    %113 = vector.extract_strided_slice %111 {offsets = [0, 1], sizes = [8, 1], strides = [1, 1]} : vector<8x2xf32> to vector<8x1xf32>
    %114 = arith.mulf %112, %112 : vector<8x1xf32>
    %115 = arith.subf %113, %114 : vector<8x1xf32>
    %cst_63 = arith.constant 0.000000e+00 : f32
    %116 = vector.broadcast %cst_63 : f32 to vector<8x1xf32>
    %117 = arith.maximumf %115, %116 : vector<8x1xf32>
    %cst_64 = arith.constant 9.99999974E-6 : f32
    %118 = vector.broadcast %cst_64 : f32 to vector<8x1xf32>
    %119 = arith.addf %117, %118 : vector<8x1xf32>
    %120 = math.rsqrt %119 : vector<8x1xf32>
    %c1_65 = arith.constant 1 : index
    %c0_66 = arith.constant 0 : index
    %c0_67 = arith.constant 0 : index
    %121 = vector.load %arg6[%c1_65, %c0_66, %c0_67] : memref<2x8x1xf32, #tpu.memory_space<vmem>>, vector<1x8x1xf32>
    %122 = vector.shape_cast %121 : vector<1x8x1xf32> to vector<8x1xf32>
    %c1_68 = arith.constant 1 : index
    %c0_69 = arith.constant 0 : index
    %c0_70 = arith.constant 0 : index
    %123 = vector.load %arg7[%c1_68, %c0_69, %c0_70] : memref<2x8x1xf32, #tpu.memory_space<vmem>>, vector<1x8x1xf32>
    %124 = vector.shape_cast %123 : vector<1x8x1xf32> to vector<8x1xf32>
    %125 = arith.mulf %120, %122 : vector<8x1xf32>
    %126 = arith.subf %1, %112 : vector<8x1xf32>
    %127 = arith.mulf %126, %125 : vector<8x1xf32>
    %128 = arith.addf %124, %127 : vector<8x1xf32>
    %129 = vector.broadcast %125 : vector<8x1xf32> to vector<8x128xf32>
    %130 = arith.mulf %92, %129 : vector<8x128xf32>
    %131 = vector.broadcast %128 : vector<8x1xf32> to vector<8x128xf32>
    %132 = arith.addf %130, %131 : vector<8x128xf32>
    %cst_71 = arith.constant 0.000000e+00 : f32
    %133 = vector.broadcast %cst_71 : f32 to vector<8x128xf32>
    %134 = arith.subf %133, %132 : vector<8x128xf32>
    %135 = math.exp %134 : vector<8x128xf32>
    %cst_72 = arith.constant 1.000000e+00 : f32
    %136 = vector.broadcast %cst_72 : f32 to vector<8x128xf32>
    %137 = arith.addf %136, %135 : vector<8x128xf32>
    %138 = tpu.reciprocal %137 : vector<8x128xf32> -> vector<8x128xf32>
    %139 = arith.mulf %132, %138 : vector<8x128xf32>
    %c1_73 = arith.constant 1 : index
    %c0_74 = arith.constant 0 : index
    %c0_75 = arith.constant 0 : index
    %140 = vector.load %arg8[%c1_73, %c0_74, %c0_75] : memref<2x8x128xf32, #tpu.memory_space<vmem>>, vector<1x8x128xf32>
    %141 = vector.shape_cast %140 : vector<1x8x128xf32> to vector<8x128xf32>
    %142 = vector.shape_cast %139 : vector<8x128xf32> to vector<1x8x128xf32>
    tpu.vector_store %arg8[%c1_73, %c0_74, %c0_75], %142 {strides = array<i32>} : memref<2x8x128xf32, #tpu.memory_space<vmem>>, vector<1x8x128xf32>,
    return
  }
  func.func @transform_0(%arg0: i32) -> (i32, i32, i32) {
    %c0_i32 = arith.constant 0 : i32
    %c0_i32_0 = arith.constant 0 : i32
    %c0_i32_1 = arith.constant 0 : i32
    return %arg0, %c0_i32, %c0_i32_0 : i32, i32, i32
  }
  func.func @transform_1(%arg0: i32) -> (i32, i32) {
    %c0_i32 = arith.constant 0 : i32
    %c0_i32_0 = arith.constant 0 : i32
    %c0_i32_1 = arith.constant 0 : i32
    return %c0_i32, %c0_i32_0 : i32, i32
  }
  func.func @transform_2(%arg0: i32) -> (i32, i32) {
    %c0_i32 = arith.constant 0 : i32
    %c0_i32_0 = arith.constant 0 : i32
    %c0_i32_1 = arith.constant 0 : i32
    return %c0_i32, %c0_i32_0 : i32, i32
  }
  func.func @transform_3(%arg0: i32) -> (i32, i32) {
    %c0_i32 = arith.constant 0 : i32
    %c0_i32_0 = arith.constant 0 : i32
    %c0_i32_1 = arith.constant 0 : i32
    return %c0_i32, %c0_i32_0 : i32, i32
  }
  func.func @transform_4(%arg0: i32) -> (i32, i32) {
    %c0_i32 = arith.constant 0 : i32
    %c0_i32_0 = arith.constant 0 : i32
    %c0_i32_1 = arith.constant 0 : i32
    return %c0_i32, %c0_i32_0 : i32, i32
  }
  func.func @transform_5(%arg0: i32) -> (i32, i32, i32) {
    %c0_i32 = arith.constant 0 : i32
    %c0_i32_0 = arith.constant 0 : i32
    %c0_i32_1 = arith.constant 0 : i32
    return %arg0, %c0_i32, %c0_i32_0 : i32, i32, i32
  }
  func.func @transform_6(%arg0: i32) -> (i32, i32, i32) {
    %c0_i32 = arith.constant 0 : i32
    %c0_i32_0 = arith.constant 0 : i32
    %c0_i32_1 = arith.constant 0 : i32
    return %arg0, %c0_i32, %c0_i32_0 : i32, i32, i32
  }
  func.func @transform_7(%arg0: i32) -> (i32, i32, i32) {
    %c0_i32 = arith.constant 0 : i32
    %c0_i32_0 = arith.constant 0 : i32
    %c0_i32_1 = arith.constant 0 : i32
    return %arg0, %c0_i32, %c0_i32_0 : i32, i32, i32
  }
}

</mosaic_0001>

<llo_original>
// kernel: tpu_custom_call.1
$region0: #{tpu_custom_call.1}
  #allocation0 [shape = 'u32[]', space=smem, size = 0x4, offset = 0x4, fixed_abs, tag = 'smem constant byte address 0x4 - core index']
  #allocation1 [shape = 'u32[144,128]{1,0:T(1,128)}', space=vmem, size = 0x12000, scoped, tag = 'internal scratch']
  #allocation2 [shape = 'f32[24,128]{1,0:T(8,128)}', space=vmem, size = 0x3000, scoped, tag = 'scratch operand']
  %s0 = inlined_call_operand.vmem [shape: f32[2,8,128], index: 0, kind: input, shape index: {}]
  %s1 = inlined_call_operand.vmem [shape: f32[8,24], index: 1, kind: input, shape index: {}]
  %s2 = inlined_call_operand.vmem [shape: f32[8,1], index: 2, kind: input, shape index: {}]
  %s3 = inlined_call_operand.vmem [shape: f32[8,8], index: 3, kind: input, shape index: {}]
  %s4 = inlined_call_operand.vmem [shape: f32[8,8], index: 4, kind: input, shape index: {}]
  %s5 = inlined_call_operand.vmem [shape: f32[2,8,1], index: 5, kind: input, shape index: {}]
  %s6 = inlined_call_operand.vmem [shape: f32[2,8,1], index: 6, kind: input, shape index: {}]
  %s7 = inlined_call_operand.hbm [shape: f32[2,8,128], index: 7, kind: output, shape index: {}]
  %s8 = sld [smem:[#allocation0]]
  $region38: #{tpu_custom_call.1} parent=0
    _
  %s10 = ssub.s32 1, %s8
  %s11 = scalar_select 0, %s10, %s8
  $region1: #{tpu_custom_call.1} parent=0
    #allocation3 [shape = 'u8[8192]{0}', space=vmem, size = 0x2000, scoped, tag = 'output window, operand 0, single buffered']
    #allocation4 [shape = 's32[1]{0}', space=sflag, size = 0x4, scoped, tag = 'scoped memory for tpu_custom_call.1']
    %12 = vsyncpa [#allocation4], 0
    // Predicated region
    $region2: #{tpu_custom_call.1} parent=1 // pred_check
      _
    $region3: #{tpu_custom_call.1} parent=1 // pred_check_branch
      %14 = sbr.rel (0) target = $region5
    $region4: #{tpu_custom_call.1} parent=1 // pred_region
      _
    $region5: #{tpu_custom_call.1} parent=1 // pred_fallthru
      _
    // Predicated region
    $region6: #{tpu_custom_call.1} parent=1 // pred_check
      _
    $region7: #{tpu_custom_call.1} parent=1 // pred_check_branch
      %16 = sbr.rel (0) target = $region9
    $region8: #{tpu_custom_call.1} parent=1 // pred_region
      _
    $region9: #{tpu_custom_call.1} parent=1 // pred_fallthru
      _
    // Predicated region
    $region10: #{tpu_custom_call.1} parent=1 // pred_check
      _
    $region11: #{tpu_custom_call.1} parent=1 // pred_check_branch
      %18 = sbr.rel (0) target = $region13
    $region12: #{tpu_custom_call.1} parent=1 // pred_region
      _
    $region13: #{tpu_custom_call.1} parent=1 // pred_fallthru
      _
    // Predicated region
    $region14: #{tpu_custom_call.1} parent=1 // pred_check
      _
    $region15: #{tpu_custom_call.1} parent=1 // pred_check_branch
      %20 = sbr.rel (0) target = $region17
    $region16: #{tpu_custom_call.1} parent=1 // pred_region
      _
    $region17: #{tpu_custom_call.1} parent=1 // pred_fallthru
      _
    // Predicated region
    $region18: #{tpu_custom_call.1} parent=1 // pred_check
      _
    $region19: #{tpu_custom_call.1} parent=1 // pred_check_branch
      %22 = sbr.rel (0) target = $region21
    $region20: #{tpu_custom_call.1} parent=1 // pred_region
      _
    $region21: #{tpu_custom_call.1} parent=1 // pred_fallthru
      _
    // Predicated region
    $region22: #{tpu_custom_call.1} parent=1 // pred_check
      _
    $region23: #{tpu_custom_call.1} parent=1 // pred_check_branch
      %24 = sbr.rel (0) target = $region25
    $region24: #{tpu_custom_call.1} parent=1 // pred_region
      _
    $region25: #{tpu_custom_call.1} parent=1 // pred_fallthru
      _
    // Predicated region
    $region26: #{tpu_custom_call.1} parent=1 // pred_check
      _
    $region27: #{tpu_custom_call.1} parent=1 // pred_check_branch
      %26 = sbr.rel (0) target = $region29
    $region28: #{tpu_custom_call.1} parent=1 // pred_region
      _
    $region29: #{tpu_custom_call.1} parent=1 // pred_fallthru
      _
    %v27 = vld [vmem:[%s1] sm:$0xff]
    %v28 = vld [vmem:[%s2] sm:$0xff]
    %v29 = vld [vmem:[%s3] sm:$0xff]
    %v30 = vld [vmem:[%s4] sm:$0xff]
    %v31 = vlaneseq
    %v32 = vand.u32 %v31, 127
    %vm33 = vcmp.eq.s32.totalorder %v32, 0
    %vm34 = vcmp.eq.s32.totalorder %v32, 16
    %vm35 = vmor %vm33, %vm34
    %vm36 = vmxor %vm35, 1
    %vm37 = vcmp.eq.s32.totalorder %v32, 15
    %vm38 = vcmp.eq.s32.totalorder %v32, 127
    %vm39 = vmor %vm37, %vm38
    %vm40 = vmxor %vm39, 1
    %v41 = vld [vmem:[%s0] sm:$0xff]
    %42 = vrot.lane.b32.xlu0 %v41, 1
    %v43 = vpop.permute.xlu0 %42
    %44 = vrot.lane.b32.xlu0 %v41, 127
    %v45 = vpop.permute.xlu0 %44
    %v46 = vsel %vm36, %v43, 0.0
    %47 = vst [vmem:[#allocation2] sm:$0xff] %v46
    %48 = vst [vmem:[#allocation2 + $0x8] sm:$0xff] %v41
    %v49 = vsel %vm40, %v45, 0.0
    %50 = vst [vmem:[#allocation2 + $0x10] sm:$0xff] %v49
    %v51 = vld [vmem:[#allocation2] sm:$0xff]
    %v52 = vld [vmem:[#allocation2 + $0x8] sm:$0xff]
    %v53 = vld [vmem:[#allocation2 + $0x10] sm:$0xff]
    %vm54 = vcmask 195584
    %v56 = vsel %vm54, %v27, 0
    %58 = vmatprep.subr.mxu0 0.0
    %59 = vmatpush1.msra.mxu0 0.0
    %60 = vmatprep.subr.mxu0 0.0
    %61 = vmatpush1.msra.mxu0 0.0
    %62 = vmatprep.subr.mxu0 0.0
    %63 = vmatpush1.msra.mxu0 0.0
    %64 = vmatprep.subr.mxu0 0.0
    %65 = vmatpush1.msra.mxu0 0.0
    %66 = vmatprep.subr.mxu0 0.0
    %67 = vmatpush1.msra.mxu0 0.0
    %68 = vmatprep.subr.mxu0 0.0
    %69 = vmatpush1.msra.mxu0 0.0
    %70 = vmatprep.subr.mxu0 0.0
    %71 = vmatpush1.msra.mxu0 0.0
    %72 = vmatprep.subr.mxu0 0.0
    %73 = vmatpush1.msra.mxu0 0.0
    %74 = vmatprep.subr.mxu0 0.0
    %75 = vmatpush1.msra.mxu0 0.0
    %76 = vmatprep.subr.mxu0 0.0
    %77 = vmatpush1.msra.mxu0 0.0
    %78 = vmatprep.subr.mxu0 0.0
    %79 = vmatpush1.msra.mxu0 0.0
    %80 = vmatprep.subr.mxu0 0.0
    %81 = vmatpush1.msra.mxu0 0.0
    %82 = vmatprep.subr.mxu0 0.0
    %83 = vmatpush1.msra.mxu0 0.0
    %84 = vmatprep.subr.mxu0 0.0
    %85 = vmatpush1.msra.mxu0 %v53
    %86 = vmatprep.subr.mxu0 0.0
    %87 = vmatpush1.msra.mxu0 %v52
    %88 = vmatprep.subr.mxu0 0.0
    %89 = vmatpush1.msra.mxu0 %v51
    %90 = vmatprep.subr.mxu0 0.0
    %91 = vmatpush2.msra.mxu0 0.0
    %92 = vmatprep.subr.mxu0 0.0
    %93 = vmatpush2.msra.mxu0 0.0
    %94 = vmatprep.subr.mxu0 0.0
    %95 = vmatpush2.msra.mxu0 0.0
    %96 = vmatprep.subr.mxu0 0.0
    %97 = vmatpush2.msra.mxu0 0.0
    %98 = vmatprep.subr.mxu0 0.0
    %99 = vmatpush2.msra.mxu0 0.0
    %100 = vmatprep.subr.mxu0 0.0
    %101 = vmatpush2.msra.mxu0 0.0
    %102 = vmatprep.subr.mxu0 0.0
    %103 = vmatpush2.msra.mxu0 0.0
    %104 = vmatprep.subr.mxu0 0.0
    %105 = vmatpush2.msra.mxu0 0.0
    %106 = vmatprep.subr.mxu0 0.0
    %107 = vmatpush2.msra.mxu0 0.0
    %108 = vmatprep.subr.mxu0 0.0
    %109 = vmatpush2.msra.mxu0 0.0
    %110 = vmatprep.subr.mxu0 0.0
    %111 = vmatpush2.msra.mxu0 0.0
    %112 = vmatprep.subr.mxu0 0.0
    %113 = vmatpush2.msra.mxu0 0.0
    %114 = vmatprep.subr.mxu0 0.0
    %115 = vmatpush2.msra.mxu0 0.0
    %116 = vmatprep.subr.mxu0 0.0
    %117 = vmatpush2.msra.mxu0 0.0
    %118 = vmatprep.subr.mxu0 0.0
    %119 = vmatpush2.msra.mxu0 0.0
    %120 = vmatprep.subr.mxu0 0.0
    %121 = vmatpush2.msra.mxu0 0.0
    %122 = vmatprep.mubr.f32.mxu0 0.0
    %123 = vmatmul.mubr.f32.gmra.mxu0 %v56
    %v124 = vpop.f32.mrf.mxu0
    %v125 = vadd.f32 0.0, %v124
    %v126 = vpop.f32.mrf.mxu0
    %127 = vdwg.mxu0
    %128 = vadd.xlane.f32.xlu0 %v125
    %v129 = vpop.xlane.xlu0 %128
    %v130 = vmul.f32 %v125, %v125
    %131 = vadd.xlane.f32.xlu0 %v130
    %v132 = vpop.xlane.xlu0 %131
    %v133 = vmul.f32 %v28, 16.0
    %v134 = vadd.f32 %v129, %v133
    %v135 = vmul.f32 %v28, 2.0
    %v136 = vmul.f32 %v135, %v129
    %v137 = vadd.f32 %v132, %v136
    %v138 = vmul.f32 %v28, %v28
    %v139 = vmul.f32 %v138, 16.0
    %v140 = vadd.f32 %v137, %v139
    %142 = vrot.lane.b32.xlu0 %v140, 1
    %v143 = vpop.permute.xlu0 %142
    %vm145 = vcmask 7168
    %v146 = vsel %vm145, %v134, %v143
    %vm147 = vcmask 64512
    %v149 = vsel %vm147, %v29, 0
    %151 = vmatprep.subr.mxu0 0.0
    %152 = vmatpush1.msra.mxu0 0.0
    %153 = vmatprep.subr.mxu0 0.0
    %154 = vmatpush1.msra.mxu0 0.0
    %155 = vmatprep.subr.mxu0 0.0
    %156 = vmatpush1.msra.mxu0 0.0
    %157 = vmatprep.subr.mxu0 0.0
    %158 = vmatpush1.msra.mxu0 0.0
    %159 = vmatprep.subr.mxu0 0.0
    %160 = vmatpush1.msra.mxu0 0.0
    %161 = vmatprep.subr.mxu0 0.0
    %162 = vmatpush1.msra.mxu0 0.0
    %163 = vmatprep.subr.mxu0 0.0
    %164 = vmatpush1.msra.mxu0 0.0
    %165 = vmatprep.subr.mxu0 0.0
    %166 = vmatpush1.msra.mxu0 0.0
    %167 = vmatprep.subr.mxu0 0.0
    %168 = vmatpush1.msra.mxu0 0.0
    %169 = vmatprep.subr.mxu0 0.0
    %170 = vmatpush1.msra.mxu0 0.0
    %171 = vmatprep.subr.mxu0 0.0
    %172 = vmatpush1.msra.mxu0 0.0
    %173 = vmatprep.subr.mxu0 0.0
    %174 = vmatpush1.msra.mxu0 0.0
    %175 = vmatprep.subr.mxu0 0.0
    %176 = vmatpush1.msra.mxu0 0.0
    %177 = vmatprep.subr.mxu0 0.0
    %178 = vmatpush1.msra.mxu0 0.0
    %179 = vmatprep.subr.mxu0 0.0
    %180 = vmatpush1.msra.mxu0 0.0
    %181 = vmatprep.subr.mxu0 0.0
    %182 = vmatpush1.msra.mxu0 %v146
    %183 = vmatprep.subr.mxu0 0.0
    %184 = vmatpush2.msra.mxu0 0.0
    %185 = vmatprep.subr.mxu0 0.0
    %186 = vmatpush2.msra.mxu0 0.0
    %187 = vmatprep.subr.mxu0 0.0
    %188 = vmatpush2.msra.mxu0 0.0
    %189 = vmatprep.subr.mxu0 0.0
    %190 = vmatpush2.msra.mxu0 0.0
    %191 = vmatprep.subr.mxu0 0.0
    %192 = vmatpush2.msra.mxu0 0.0
    %193 = vmatprep.subr.mxu0 0.0
    %194 = vmatpush2.msra.mxu0 0.0
    %195 = vmatprep.subr.mxu0 0.0
    %196 = vmatpush2.msra.mxu0 0.0
    %197 = vmatprep.subr.mxu0 0.0
    %198 = vmatpush2.msra.mxu0 0.0
    %199 = vmatprep.subr.mxu0 0.0
    %200 = vmatpush2.msra.mxu0 0.0
    %201 = vmatprep.subr.mxu0 0.0
    %202 = vmatpush2.msra.mxu0 0.0
    %203 = vmatprep.subr.mxu0 0.0
    %204 = vmatpush2.msra.mxu0 0.0
    %205 = vmatprep.subr.mxu0 0.0
    %206 = vmatpush2.msra.mxu0 0.0
    %207 = vmatprep.subr.mxu0 0.0
    %208 = vmatpush2.msra.mxu0 0.0
    %209 = vmatprep.subr.mxu0 0.0
    %210 = vmatpush2.msra.mxu0 0.0
    %211 = vmatprep.subr.mxu0 0.0
    %212 = vmatpush2.msra.mxu0 0.0
    %213 = vmatprep.subr.mxu0 0.0
    %214 = vmatpush2.msra.mxu0 0.0
    %215 = vmatprep.mubr.f32.mxu0 0.0
    %216 = vmatmul.mubr.f32.gmra.mxu0 %v149
    %v217 = vpop.f32.mrf.mxu0
    %v218 = vadd.f32 0.0, %v217
    %v219 = vpop.f32.mrf.mxu0
    %220 = vdwg.mxu0
    %v222 = vsel %vm147, %v30, 0
    %224 = vmatprep.subr.mxu0 0.0
    %225 = vmatpush1.msra.mxu0 0.0
    %226 = vmatprep.subr.mxu0 0.0
    %227 = vmatpush1.msra.mxu0 0.0
    %228 = vmatprep.subr.mxu0 0.0
    %229 = vmatpush1.msra.mxu0 0.0
    %230 = vmatprep.subr.mxu0 0.0
    %231 = vmatpush1.msra.mxu0 0.0
    %232 = vmatprep.subr.mxu0 0.0
    %233 = vmatpush1.msra.mxu0 0.0
    %234 = vmatprep.subr.mxu0 0.0
    %235 = vmatpush1.msra.mxu0 0.0
    %236 = vmatprep.subr.mxu0 0.0
    %237 = vmatpush1.msra.mxu0 0.0
    %238 = vmatprep.subr.mxu0 0.0
    %239 = vmatpush1.msra.mxu0 0.0
    %240 = vmatprep.subr.mxu0 0.0
    %241 = vmatpush1.msra.mxu0 0.0
    %242 = vmatprep.subr.mxu0 0.0
    %243 = vmatpush1.msra.mxu0 0.0
    %244 = vmatprep.subr.mxu0 0.0
    %245 = vmatpush1.msra.mxu0 0.0
    %246 = vmatprep.subr.mxu0 0.0
    %247 = vmatpush1.msra.mxu0 0.0
    %248 = vmatprep.subr.mxu0 0.0
    %249 = vmatpush1.msra.mxu0 0.0
    %250 = vmatprep.subr.mxu0 0.0
    %251 = vmatpush1.msra.mxu0 0.0
    %252 = vmatprep.subr.mxu0 0.0
    %253 = vmatpush1.msra.mxu0 0.0
    %254 = vmatprep.subr.mxu0 0.0
    %255 = vmatpush1.msra.mxu0 %v218
    %256 = vmatprep.subr.mxu0 0.0
    %257 = vmatpush2.msra.mxu0 0.0
    %258 = vmatprep.subr.mxu0 0.0
    %259 = vmatpush2.msra.mxu0 0.0
    %260 = vmatprep.subr.mxu0 0.0
    %261 = vmatpush2.msra.mxu0 0.0
    %262 = vmatprep.subr.mxu0 0.0
    %263 = vmatpush2.msra.mxu0 0.0
    %264 = vmatprep.subr.mxu0 0.0
    %265 = vmatpush2.msra.mxu0 0.0
    %266 = vmatprep.subr.mxu0 0.0
    %267 = vmatpush2.msra.mxu0 0.0
    %268 = vmatprep.subr.mxu0 0.0
    %269 = vmatpush2.msra.mxu0 0.0
    %270 = vmatprep.subr.mxu0 0.0
    %271 = vmatpush2.msra.mxu0 0.0
    %272 = vmatprep.subr.mxu0 0.0
    %273 = vmatpush2.msra.mxu0 0.0
    %274 = vmatprep.subr.mxu0 0.0
    %275 = vmatpush2.msra.mxu0 0.0
    %276 = vmatprep.subr.mxu0 0.0
    %277 = vmatpush2.msra.mxu0 0.0
    %278 = vmatprep.subr.mxu0 0.0
    %279 = vmatpush2.msra.mxu0 0.0
    %280 = vmatprep.subr.mxu0 0.0
    %281 = vmatpush2.msra.mxu0 0.0
    %282 = vmatprep.subr.mxu0 0.0
    %283 = vmatpush2.msra.mxu0 0.0
    %284 = vmatprep.subr.mxu0 0.0
    %285 = vmatpush2.msra.mxu0 0.0
    %286 = vmatprep.subr.mxu0 0.0
    %287 = vmatpush2.msra.mxu0 0.0
    %288 = vmatprep.mubr.f32.mxu0 0.0
    %289 = vmatmul.mubr.f32.gmra.mxu0 %v222
    %v290 = vpop.f32.mrf.mxu0
    %v291 = vadd.f32 0.0, %v290
    %v292 = vpop.f32.mrf.mxu0
    %293 = vdwg.mxu0
    %v294 = vmul.f32 %v291, %v291
    %296 = vrot.lane.b32.xlu0 %v294, 1
    %v297 = vpop.permute.xlu0 %296
    %v299 = vsub.f32 %v291, %v297
    %v300 = vmax.f32 %v299, 0.0
    %v301 = vadd.f32 %v300, 1e-05
    %v302 = vrsqrt.pop %v301
    %v303 = vld [vmem:[%s5] sm:$0xff]
    %v304 = vld [vmem:[%s6] sm:$0xff]
    %306 = vrot.lane.b32.xlu0 %v303, 1
    %v307 = vpop.permute.xlu0 %306
    %v309 = vmul.f32 %v302, %v307
    %v310 = vsub.f32 %v28, %v291
    %312 = vrot.lane.b32.xlu0 %v309, 127
    %v313 = vpop.permute.xlu0 %312
    %v315 = vmul.f32 %v310, %v313
    %v316 = vadd.f32 %v304, %v315
    %317 = vset.pattern.permute.xlu0 1
    %318 = vperm.xlu0 %317, %v309
    %v319 = vpop.permute.xlu0 %318
    %v321 = vmul.f32 %v125, %v319
    %323 = vset.pattern.permute.xlu0 0
    %324 = vperm.xlu0 %323, %v316
    %v325 = vpop.permute.xlu0 %324
    %v327 = vadd.f32 %v321, %v325
    %v328 = vsub.f32 0.0, %v327
    %v329 = vmul.f32 %v328, 1.442695
    %v330 = vpow.pop %v329
    %v331 = vadd.f32 %v330, 1.0
    %v332 = vrcp.pop %v331
    %v333 = vmul.f32 %v327, %v332
    %334 = vst [vmem:[#allocation3] sm:$0xff] %v333
    %s335 = scalar_lea.vmem %s0, 8
    %v336 = vld [vmem:[%s335] sm:$0xff]
    %337 = vrot.lane.b32.xlu0 %v336, 1
    %v338 = vpop.permute.xlu0 %337
    %339 = vrot.lane.b32.xlu0 %v336, 127
    %v340 = vpop.permute.xlu0 %339
    %v341 = vsel %vm36, %v338, 0.0
    %342 = vst [vmem:[#allocation2] sm:$0xff] %v341
    %343 = vst [vmem:[#allocation2 + $0x8] sm:$0xff] %v336
    %v344 = vsel %vm40, %v340, 0.0
    %345 = vst [vmem:[#allocation2 + $0x10] sm:$0xff] %v344
    %v346 = vld [vmem:[#allocation2] sm:$0xff]
    %v347 = vld [vmem:[#allocation2 + $0x8] sm:$0xff]
    %v348 = vld [vmem:[#allocation2 + $0x10] sm:$0xff]
    %349 = vmatprep.subr.mxu0 0.0
    %350 = vmatpush1.msra.mxu0 0.0
    %351 = vmatprep.subr.mxu0 0.0
    %352 = vmatpush1.msra.mxu0 0.0
    %353 = vmatprep.subr.mxu0 0.0
    %354 = vmatpush1.msra.mxu0 0.0
    %355 = vmatprep.subr.mxu0 0.0
    %356 = vmatpush1.msra.mxu0 0.0
    %357 = vmatprep.subr.mxu0 0.0
    %358 = vmatpush1.msra.mxu0 0.0
    %359 = vmatprep.subr.mxu0 0.0
    %360 = vmatpush1.msra.mxu0 0.0
    %361 = vmatprep.subr.mxu0 0.0
    %362 = vmatpush1.msra.mxu0 0.0
    %363 = vmatprep.subr.mxu0 0.0
    %364 = vmatpush1.msra.mxu0 0.0
    %365 = vmatprep.subr.mxu0 0.0
    %366 = vmatpush1.msra.mxu0 0.0
    %367 = vmatprep.subr.mxu0 0.0
    %368 = vmatpush1.msra.mxu0 0.0
    %369 = vmatprep.subr.mxu0 0.0
    %370 = vmatpush1.msra.mxu0 0.0
    %371 = vmatprep.subr.mxu0 0.0
    %372 = vmatpush1.msra.mxu0 0.0
    %373 = vmatprep.subr.mxu0 0.0
    %374 = vmatpush1.msra.mxu0 0.0
    %375 = vmatprep.subr.mxu0 0.0
    %376 = vmatpush1.msra.mxu0 %v348
    %377 = vmatprep.subr.mxu0 0.0
    %378 = vmatpush1.msra.mxu0 %v347
    %379 = vmatprep.subr.mxu0 0.0
    %380 = vmatpush1.msra.mxu0 %v346
    %381 = vmatprep.subr.mxu0 0.0
    %382 = vmatpush2.msra.mxu0 0.0
    %383 = vmatprep.subr.mxu0 0.0
    %384 = vmatpush2.msra.mxu0 0.0
    %385 = vmatprep.subr.mxu0 0.0
    %386 = vmatpush2.msra.mxu0 0.0
    %387 = vmatprep.subr.mxu0 0.0
    %388 = vmatpush2.msra.mxu0 0.0
    %389 = vmatprep.subr.mxu0 0.0
    %390 = vmatpush2.msra.mxu0 0.0
    %391 = vmatprep.subr.mxu0 0.0
    %392 = vmatpush2.msra.mxu0 0.0
    %393 = vmatprep.subr.mxu0 0.0
    %394 = vmatpush2.msra.mxu0 0.0
    %395 = vmatprep.subr.mxu0 0.0
    %396 = vmatpush2.msra.mxu0 0.0
    %397 = vmatprep.subr.mxu0 0.0
    %398 = vmatpush2.msra.mxu0 0.0
    %399 = vmatprep.subr.mxu0 0.0
    %400 = vmatpush2.msra.mxu0 0.0
    %401 = vmatprep.subr.mxu0 0.0
    %402 = vmatpush2.msra.mxu0 0.0
    %403 = vmatprep.subr.mxu0 0.0
    %404 = vmatpush2.msra.mxu0 0.0
    %405 = vmatprep.subr.mxu0 0.0
    %406 = vmatpush2.msra.mxu0 0.0
    %407 = vmatprep.subr.mxu0 0.0
    %408 = vmatpush2.msra.mxu0 0.0
    %409 = vmatprep.subr.mxu0 0.0
    %410 = vmatpush2.msra.mxu0 0.0
    %411 = vmatprep.subr.mxu0 0.0
    %412 = vmatpush2.msra.mxu0 0.0
    %413 = vmatprep.mubr.f32.mxu0 0.0
    %414 = vmatmul.mubr.f32.gmra.mxu0 %v56
    %v415 = vpop.f32.mrf.mxu0
    %v416 = vadd.f32 0.0, %v415
    %v417 = vpop.f32.mrf.mxu0
    %418 = vdwg.mxu0
    %419 = vadd.xlane.f32.xlu0 %v416
    %v420 = vpop.xlane.xlu0 %419
    %v421 = vmul.f32 %v416, %v416
    %422 = vadd.xlane.f32.xlu0 %v421
    %v423 = vpop.xlane.xlu0 %422
    %v424 = vadd.f32 %v420, %v133
    %v425 = vmul.f32 %v135, %v420
    %v426 = vadd.f32 %v423, %v425
    %v427 = vadd.f32 %v426, %v139
    %429 = vrot.lane.b32.xlu0 %v427, 1
    %v430 = vpop.permute.xlu0 %429
    %v432 = vsel %vm145, %v424, %v430
    %433 = vmatprep.subr.mxu0 0.0
    %434 = vmatpush1.msra.mxu0 0.0
    %435 = vmatprep.subr.mxu0 0.0
    %436 = vmatpush1.msra.mxu0 0.0
    %437 = vmatprep.subr.mxu0 0.0
    %438 = vmatpush1.msra.mxu0 0.0
    %439 = vmatprep.subr.mxu0 0.0
    %440 = vmatpush1.msra.mxu0 0.0
    %441 = vmatprep.subr.mxu0 0.0
    %442 = vmatpush1.msra.mxu0 0.0
    %443 = vmatprep.subr.mxu0 0.0
    %444 = vmatpush1.msra.mxu0 0.0
    %445 = vmatprep.subr.mxu0 0.0
    %446 = vmatpush1.msra.mxu0 0.0
    %447 = vmatprep.subr.mxu0 0.0
    %448 = vmatpush1.msra.mxu0 0.0
    %449 = vmatprep.subr.mxu0 0.0
    %450 = vmatpush1.msra.mxu0 0.0
    %451 = vmatprep.subr.mxu0 0.0
    %452 = vmatpush1.msra.mxu0 0.0
    %453 = vmatprep.subr.mxu0 0.0
    %454 = vmatpush1.msra.mxu0 0.0
    %455 = vmatprep.subr.mxu0 0.0
    %456 = vmatpush1.msra.mxu0 0.0
    %457 = vmatprep.subr.mxu0 0.0
    %458 = vmatpush1.msra.mxu0 0.0
    %459 = vmatprep.subr.mxu0 0.0
    %460 = vmatpush1.msra.mxu0 0.0
    %461 = vmatprep.subr.mxu0 0.0
    %462 = vmatpush1.msra.mxu0 0.0
    %463 = vmatprep.subr.mxu0 0.0
    %464 = vmatpush1.msra.mxu0 %v432
    %465 = vmatprep.subr.mxu0 0.0
    %466 = vmatpush2.msra.mxu0 0.0
    %467 = vmatprep.subr.mxu0 0.0
    %468 = vmatpush2.msra.mxu0 0.0
    %469 = vmatprep.subr.mxu0 0.0
    %470 = vmatpush2.msra.mxu0 0.0
    %471 = vmatprep.subr.mxu0 0.0
    %472 = vmatpush2.msra.mxu0 0.0
    %473 = vmatprep.subr.mxu0 0.0
    %474 = vmatpush2.msra.mxu0 0.0
    %475 = vmatprep.subr.mxu0 0.0
    %476 = vmatpush2.msra.mxu0 0.0
    %477 = vmatprep.subr.mxu0 0.0
    %478 = vmatpush2.msra.mxu0 0.0
    %479 = vmatprep.subr.mxu0 0.0
    %480 = vmatpush2.msra.mxu0 0.0
    %481 = vmatprep.subr.mxu0 0.0
    %482 = vmatpush2.msra.mxu0 0.0
    %483 = vmatprep.subr.mxu0 0.0
    %484 = vmatpush2.msra.mxu0 0.0
    %485 = vmatprep.subr.mxu0 0.0
    %486 = vmatpush2.msra.mxu0 0.0
    %487 = vmatprep.subr.mxu0 0.0
    %488 = vmatpush2.msra.mxu0 0.0
    %489 = vmatprep.subr.mxu0 0.0
    %490 = vmatpush2.msra.mxu0 0.0
    %491 = vmatprep.subr.mxu0 0.0
    %492 = vmatpush2.msra.mxu0 0.0
    %493 = vmatprep.subr.mxu0 0.0
    %494 = vmatpush2.msra.mxu0 0.0
    %495 = vmatprep.subr.mxu0 0.0
    %496 = vmatpush2.msra.mxu0 0.0
    %497 = vmatprep.mubr.f32.mxu0 0.0
    %498 = vmatmul.mubr.f32.gmra.mxu0 %v149
    %v499 = vpop.f32.mrf.mxu0
    %v500 = vadd.f32 0.0, %v499
    %v501 = vpop.f32.mrf.mxu0
    %502 = vdwg.mxu0
    %503 = vmatprep.subr.mxu0 0.0
    %504 = vmatpush1.msra.mxu0 0.0
    %505 = vmatprep.subr.mxu0 0.0
    %506 = vmatpush1.msra.mxu0 0.0
    %507 = vmatprep.subr.mxu0 0.0
    %508 = vmatpush1.msra.mxu0 0.0
    %509 = vmatprep.subr.mxu0 0.0
    %510 = vmatpush1.msra.mxu0 0.0
    %511 = vmatprep.subr.mxu0 0.0
    %512 = vmatpush1.msra.mxu0 0.0
    %513 = vmatprep.subr.mxu0 0.0
    %514 = vmatpush1.msra.mxu0 0.0
    %515 = vmatprep.subr.mxu0 0.0
    %516 = vmatpush1.msra.mxu0 0.0
    %517 = vmatprep.subr.mxu0 0.0
    %518 = vmatpush1.msra.mxu0 0.0
    %519 = vmatprep.subr.mxu0 0.0
    %520 = vmatpush1.msra.mxu0 0.0
    %521 = vmatprep.subr.mxu0 0.0
    %522 = vmatpush1.msra.mxu0 0.0
    %523 = vmatprep.subr.mxu0 0.0
    %524 = vmatpush1.msra.mxu0 0.0
    %525 = vmatprep.subr.mxu0 0.0
    %526 = vmatpush1.msra.mxu0 0.0
    %527 = vmatprep.subr.mxu0 0.0
    %528 = vmatpush1.msra.mxu0 0.0
    %529 = vmatprep.subr.mxu0 0.0
    %530 = vmatpush1.msra.mxu0 0.0
    %531 = vmatprep.subr.mxu0 0.0
    %532 = vmatpush1.msra.mxu0 0.0
    %533 = vmatprep.subr.mxu0 0.0
    %534 = vmatpush1.msra.mxu0 %v500
    %535 = vmatprep.subr.mxu0 0.0
    %536 = vmatpush2.msra.mxu0 0.0
    %537 = vmatprep.subr.mxu0 0.0
    %538 = vmatpush2.msra.mxu0 0.0
    %539 = vmatprep.subr.mxu0 0.0
    %540 = vmatpush2.msra.mxu0 0.0
    %541 = vmatprep.subr.mxu0 0.0
    %542 = vmatpush2.msra.mxu0 0.0
    %543 = vmatprep.subr.mxu0 0.0
    %544 = vmatpush2.msra.mxu0 0.0
    %545 = vmatprep.subr.mxu0 0.0
    %546 = vmatpush2.msra.mxu0 0.0
    %547 = vmatprep.subr.mxu0 0.0
    %548 = vmatpush2.msra.mxu0 0.0
    %549 = vmatprep.subr.mxu0 0.0
    %550 = vmatpush2.msra.mxu0 0.0
    %551 = vmatprep.subr.mxu0 0.0
    %552 = vmatpush2.msra.mxu0 0.0
    %553 = vmatprep.subr.mxu0 0.0
    %554 = vmatpush2.msra.mxu0 0.0
    %555 = vmatprep.subr.mxu0 0.0
    %556 = vmatpush2.msra.mxu0 0.0
    %557 = vmatprep.subr.mxu0 0.0
    %558 = vmatpush2.msra.mxu0 0.0
    %559 = vmatprep.subr.mxu0 0.0
    %560 = vmatpush2.msra.mxu0 0.0
    %561 = vmatprep.subr.mxu0 0.0
    %562 = vmatpush2.msra.mxu0 0.0
    %563 = vmatprep.subr.mxu0 0.0
    %564 = vmatpush2.msra.mxu0 0.0
    %565 = vmatprep.subr.mxu0 0.0
    %566 = vmatpush2.msra.mxu0 0.0
    %567 = vmatprep.mubr.f32.mxu0 0.0
    %568 = vmatmul.mubr.f32.gmra.mxu0 %v222
    %v569 = vpop.f32.mrf.mxu0
    %v570 = vadd.f32 0.0, %v569
    %v571 = vpop.f32.mrf.mxu0
    %572 = vdwg.mxu0
    %v573 = vmul.f32 %v570, %v570
    %575 = vrot.lane.b32.xlu0 %v573, 1
    %v576 = vpop.permute.xlu0 %575
    %v578 = vsub.f32 %v570, %v576
    %v579 = vmax.f32 %v578, 0.0
    %v580 = vadd.f32 %v579, 1e-05
    %v581 = vrsqrt.pop %v580
    %s582 = scalar_lea.vmem %s5, 8
    %v583 = vld [vmem:[%s582] sm:$0xff]
    %s584 = scalar_lea.vmem %s6, 8
    %v585 = vld [vmem:[%s584] sm:$0xff]
    %587 = vrot.lane.b32.xlu0 %v583, 1
    %v588 = vpop.permute.xlu0 %587
    %v590 = vmul.f32 %v581, %v588
    %v591 = vsub.f32 %v28, %v570
    %593 = vrot.lane.b32.xlu0 %v590, 127
    %v594 = vpop.permute.xlu0 %593
    %v596 = vmul.f32 %v591, %v594
    %v597 = vadd.f32 %v585, %v596
    %598 = vset.pattern.permute.xlu0 1
    %599 = vperm.xlu0 %598, %v590
    %v600 = vpop.permute.xlu0 %599
    %v602 = vmul.f32 %v416, %v600
    %604 = vset.pattern.permute.xlu0 0
    %605 = vperm.xlu0 %604, %v597
    %v606 = vpop.permute.xlu0 %605
    %v608 = vadd.f32 %v602, %v606
    %v609 = vsub.f32 0.0, %v608
    %v610 = vmul.f32 %v609, 1.442695
    %v611 = vpow.pop %v610
    %v612 = vadd.f32 %v611, 1.0
    %v613 = vrcp.pop %v612
    %v614 = vmul.f32 %v608, %v613
    %s615 = scalar_lea.vmem [#allocation3], 8
    %616 = vst [vmem:[%s615] sm:$0xff] %v614
    // Predicated region
    $region30: #{tpu_custom_call.1} parent=1 // pred_check
      _
    $region31: #{tpu_custom_call.1} parent=1 // pred_check_branch
      %618 = sbr.rel (0) target = $region33
    $region32: #{tpu_custom_call.1} parent=1 // pred_region
      %s620 = ssub.s32 256, 256
      %621 = vsyncadd [#allocation4], %s620
      %s622 = sshll.u32 [#allocation3], 4
      %s623 = int_to_ptr.vmem [resolvable:$true] %s622
      %628 = dma.vmem_to_hbm [thread:$0]  %s623, 256, %s7, [#allocation4], 128, 128, 8
    $region33: #{tpu_custom_call.1} parent=1 // pred_fallthru
      _
    // Predicated region
    $region34: #{tpu_custom_call.1} parent=1 // pred_check
      _
    $region35: #{tpu_custom_call.1} parent=1 // pred_check_branch
      %630 = sbr.rel (0) target = $region37
    $region36: #{tpu_custom_call.1} parent=1 // pred_region
      %631 = dma.done [#allocation4], 256
    $region37: #{tpu_custom_call.1} parent=1 // pred_fallthru
      _
    %632 = vsyncpa [#allocation4], 1

</llo_original>
